<compile_context>
chip_gen: v7x
topology: tpu7x:2x2x1
jax: 0.10.0
libtpu: 0.0.40
codegen_flags: <defaults>
</compile_context>

<pallas_src>
import jax
import jax.numpy as jnp
from jax.experimental import pallas as pl
from jax.experimental.pallas import tpu as pltpu

MAX_TILE_B = 2048


def _ff_kernel(xcat_ref, xcont_ref,          # (tb, n_cat) i32, (tb, n_cont) bf16
               m_emb_ref, w1c_ref, b1_ref,   # (sc, h1p) bf16, (n_cont, h1p) bf16, (1, h1p) f32
               w2_ref, b2_ref,               # (h1p, h2p) bf16, (1, h2p) f32
               w3_ref, b3_ref,               # (1, h2p) f32, (1, 1) f32
               o_ref):                       # (tb, 1) f32
    tb = xcat_ref.shape[0]
    n_cat = xcat_ref.shape[1]
    sc = m_emb_ref.shape[0]

    # Combined one-hot over all categorical features.  Ids are pre-offset in
    # the wrapper into disjoint column ranges, so OR of per-feature hits is the
    # exact multi-feature one-hot matrix.
    cols = jax.lax.broadcasted_iota(jnp.int32, (tb, sc), 1)
    hit = xcat_ref[:, 0:1] == cols
    for i in range(1, n_cat):                # static unroll, n_cat is tiny
        hit = jnp.logical_or(hit, xcat_ref[:, i:i + 1] == cols)
    onehot = jnp.where(hit, 1.0, 0.0).astype(jnp.bfloat16)

    # Layer 1: embedding lookup fused into the matmul (onehot @ (emb @ W1)),
    # plus the BN1-folded continuous part; bias + relu.  The K=n_cont dot is
    # tiny and kept separate to avoid an in-kernel lane concat.
    h = jnp.dot(onehot, m_emb_ref[...], preferred_element_type=jnp.float32)
    h = h + jnp.dot(xcont_ref[...], w1c_ref[...],
                    preferred_element_type=jnp.float32)
    h = jnp.maximum(h + b1_ref[...], 0.0)

    # Layer 2 (BN2 folded) + relu; bf16 operands, f32 accumulation.
    h = jnp.dot(h.astype(jnp.bfloat16), w2_ref[...],
                preferred_element_type=jnp.float32)
    h = jnp.maximum(h + b2_ref[...], 0.0)

    # Layer 3 (BN3 folded): logit = <h, w3_row> + b3, narrow (tb, 1) store.
    o_ref[...] = jnp.sum(h * w3_ref[...], axis=-1, keepdims=True) + b3_ref[...]


def _bn_affine(gamma, beta, running_mean, running_var, eps=1e-5):
    """Fold eval-mode BatchNorm1d into per-feature scale/shift."""
    scale = gamma / jnp.sqrt(running_var + eps)
    shift = beta - running_mean * scale
    return scale, shift


def _round_up(x, m):
    return (x + m - 1) // m * m


def ff_model_init(key, embedding_sizes, n_cont):
    """Deterministic parameter init matching the shapes of FFModel.__init__."""
    n_emb = sum(size for _, size in embedding_sizes)
    d_in = n_emb + n_cont
    ks = iter(jax.random.split(key, 32))

    def lin(k, fan_in, fan_out):
        k1, k2 = jax.random.split(k)
        bound = 1.0 / jnp.sqrt(fan_in)
        w = jax.random.uniform(k1, (fan_in, fan_out), jnp.float32, -bound, bound)
        b = jax.random.uniform(k2, (1, fan_out), jnp.float32, -bound, bound)
        return w, b

    params = {
        "emb": [jax.random.normal(next(ks), (cats, size), jnp.float32)
                for cats, size in embedding_sizes],
        "lin1": lin(next(ks), d_in, 200),
        "lin2": lin(next(ks), 200, 70),
        "lin3": lin(next(ks), 70, 1),
    }
    # BatchNorm params (eval mode): gamma, beta, running_mean, running_var
    for name, dim in (("bn1", n_cont), ("bn2", 200), ("bn3", 70)):
        params[name] = (
            1.0 + 0.1 * jax.random.normal(next(ks), (dim,), jnp.float32),
            0.1 * jax.random.normal(next(ks), (dim,), jnp.float32),
            0.1 * jax.random.normal(next(ks), (dim,), jnp.float32),
            0.5 + jnp.abs(jax.random.normal(next(ks), (dim,), jnp.float32)),
        )
    return params


@jax.jit
def ff_model_forward(params, x_cat, x_cont):
    """Forward pass of FFModel in eval mode."""
    # Static dims (concrete at trace time).
    n_cat = len(params["emb"])
    emb_dims = [int(t.shape[1]) for t in params["emb"]]
    cat_cards = [int(t.shape[0]) for t in params["emb"]]
    n_emb = sum(emb_dims)
    sum_cats = sum(cat_cards)
    n_cont = int(x_cont.shape[1])
    B = int(x_cat.shape[0])

    w1, b1 = params["lin1"]   # (n_emb + n_cont, 200), (1, 200)
    w2, b2 = params["lin2"]   # (200, 70), (1, 70)
    w3, b3 = params["lin3"]   # (70, 1), (1, 1)
    h1 = int(w1.shape[1])
    h2 = int(w2.shape[1])
    h1_pad = _round_up(h1, 128)   # 200 -> 256
    h2_pad = _round_up(h2, 128)   # 70  -> 128

    # --- fold BN layers into the adjacent Linear weights (eval mode) ---
    bn1_s, bn1_t = _bn_affine(*params["bn1"])
    w1c = bn1_s[:, None] * w1[n_emb:, :]
    b1_f = b1 + (bn1_t @ w1[n_emb:, :]).reshape(1, -1)

    bn2_s, bn2_t = _bn_affine(*params["bn2"])
    w2_f = bn2_s[:, None] * w2
    b2_f = b2 + (bn2_t @ w2).reshape(1, -1)

    bn3_s, bn3_t = _bn_affine(*params["bn3"])
    w3_f = bn3_s[:, None] * w3                       # (70, 1)
    b3_f = b3 + (bn3_t @ w3).reshape(1, 1)           # (1, 1)

    # --- fuse embedding tables into lin1: M_emb = stack_i(emb_i @ W1_rows_i) ---
    m_parts = []
    row_off = 0
    for i in range(n_cat):
        m_parts.append(params["emb"][i] @ w1[row_off:row_off + emb_dims[i], :])
        row_off += emb_dims[i]
    m_emb = jnp.concatenate(m_parts, axis=0)          # (sum_cats, h1)

    # --- zero-pad + bf16-cast weights (exact: relu(0)=0, padded rows/cols 0) ---
    sc_pad = _round_up(sum_cats, 8)
    m_emb_p = jnp.pad(m_emb, ((0, sc_pad - sum_cats),
                              (0, h1_pad - h1))).astype(jnp.bfloat16)
    w1c_p = jnp.pad(w1c, ((0, 0), (0, h1_pad - h1))).astype(jnp.bfloat16)
    b1_p = jnp.pad(b1_f, ((0, 0), (0, h1_pad - h1)))
    w2_p = jnp.pad(w2_f, ((0, h1_pad - h1), (0, h2_pad - h2))).astype(jnp.bfloat16)
    b2_p = jnp.pad(b2_f, ((0, 0), (0, h2_pad - h2)))
    w3_p = jnp.pad(w3_f[:, 0], (0, h2_pad - h2)).reshape(1, h2_pad)   # f32 row
    b3_p = b3_f                                                        # (1, 1) f32

    # --- activations: offset categorical ids into disjoint one-hot columns ---
    col_off = jnp.asarray([sum(cat_cards[:i]) for i in range(n_cat)], jnp.int32)
    x_cat_off = x_cat.astype(jnp.int32) + col_off[None, :]
    x_cont_bf = x_cont.astype(jnp.bfloat16)

    # --- batch tiling: balanced tile, even number of tiles (>= 2) so both ---
    # --- v7x TensorCores get work; tile_b multiple of 16 (bf16 sublanes). ---
    num_tiles = _round_up(max(1, pl.cdiv(B, MAX_TILE_B)), 2)
    tile_b = max(16, _round_up(pl.cdiv(B, num_tiles), 16))
    num_tiles = _round_up(max(1, pl.cdiv(B, tile_b)), 2)
    B_pad = num_tiles * tile_b
    if B_pad != B:
        x_cat_off = jnp.pad(x_cat_off, ((0, B_pad - B), (0, 0)))
        x_cont_bf = jnp.pad(x_cont_bf, ((0, B_pad - B), (0, 0)))

    weight_bytes = (2 * (m_emb_p.size + w1c_p.size + w2_p.size)
                    + 4 * (b1_p.size + b2_p.size + w3_p.size + b3_p.size))
    cost = pl.CostEstimate(
        flops=2 * B_pad * (sc_pad * h1_pad + n_cont * h1_pad
                           + h1_pad * h2_pad + h2_pad),
        transcendentals=0,
        bytes_accessed=B_pad * (4 * n_cat + 2 * n_cont + 4) + weight_bytes,
    )

    resident = lambda i: (0, 0)   # weights keep the same block -> stay in VMEM
    out = pl.pallas_call(
        _ff_kernel,
        out_shape=jax.ShapeDtypeStruct((B_pad, 1), jnp.float32),
        grid=(num_tiles,),
        in_specs=[
            pl.BlockSpec((tile_b, n_cat), lambda i: (i, 0)),
            pl.BlockSpec((tile_b, n_cont), lambda i: (i, 0)),
            pl.BlockSpec((sc_pad, h1_pad), resident),
            pl.BlockSpec((n_cont, h1_pad), resident),
            pl.BlockSpec((1, h1_pad), resident),
            pl.BlockSpec((h1_pad, h2_pad), resident),
            pl.BlockSpec((1, h2_pad), resident),
            pl.BlockSpec((1, h2_pad), resident),
            pl.BlockSpec((1, 1), resident),
        ],
        out_specs=pl.BlockSpec((tile_b, 1), lambda i: (i, 0)),
        compiler_params=pltpu.CompilerParams(
            dimension_semantics=("parallel",),
        ),
        cost_estimate=cost,
    )(x_cat_off, x_cont_bf, m_emb_p, w1c_p, b1_p, w2_p, b2_p, w3_p, b3_p)

    # torch's x.squeeze(): (B, 1) -> (B,)  (batch > 1 assumed)
    return out[:B, 0]


def _reference_forward(params, x_cat, x_cont):
    """Pure-JAX f32 reference (unfolded, matches the torch module in eval)."""
    embs = [jnp.take(tbl, x_cat[:, i], axis=0) for i, tbl in enumerate(params["emb"])]
    x_emb = jnp.concatenate(embs, axis=1)
    bn1_s, bn1_t = _bn_affine(*params["bn1"])
    x2 = x_cont * bn1_s + bn1_t
    x = jnp.concatenate([x_emb, x2], axis=1)
    w1, b1 = params["lin1"]; w2, b2 = params["lin2"]; w3, b3 = params["lin3"]
    h = jnp.maximum(x @ w1 + b1, 0.0)
    bn2_s, bn2_t = _bn_affine(*params["bn2"])
    h = h * bn2_s + bn2_t
    h = jnp.maximum(h @ w2 + b2, 0.0)
    bn3_s, bn3_t = _bn_affine(*params["bn3"])
    h = h * bn3_s + bn3_t
    out = h @ w3 + b3
    return out[:, 0]


if __name__ == "__main__":
    key = jax.random.PRNGKey(0)
    k_params, k_cat, k_cont = jax.random.split(key, 3)

    # Small shapes consistent with the module:
    embedding_sizes = [(10, 5), (8, 4), (6, 3)]   # n_emb = 12
    n_cont = 4
    batch = 8

    params = ff_model_init(k_params, embedding_sizes, n_cont)

    cat_keys = jax.random.split(k_cat, len(embedding_sizes))
    x_cat = jnp.stack(
        [jax.random.randint(cat_keys[i], (batch,), 0, cats)
         for i, (cats, _) in enumerate(embedding_sizes)],
        axis=1,
    ).astype(jnp.int32)                                               # (8, 3)
    x_cont = jax.random.normal(k_cont, (batch, n_cont), jnp.float32)  # (8, 4)

    out = ff_model_forward(params, x_cat, x_cont)
    out = jax.block_until_ready(out)

    ref = _reference_forward(params, x_cat, x_cont)
    assert out.shape == (batch,), out.shape
    # bf16 operands with f32 accumulation: compare against the f32 reference
    # with a tolerance sized for bf16 input/weight rounding (~0.2-0.5% rel).
    assert jnp.allclose(out, ref, atol=2e-2, rtol=2e-2), (out, ref)

    print("KERNEL_OK")
</pallas_src>

<mosaic_0001>
module attributes {stable_mosaic.version = 11 : i64} {
  func.func @_ff_kernel(%arg0: i32, %arg1: memref<16x3xi32, #tpu.memory_space<vmem>>, %arg2: memref<16x4xbf16, #tpu.memory_space<vmem>>, %arg3: memref<24x256xbf16, #tpu.memory_space<vmem>>, %arg4: memref<4x256xbf16, #tpu.memory_space<vmem>>, %arg5: memref<1x256xf32, #tpu.memory_space<vmem>>, %arg6: memref<256x128xbf16, #tpu.memory_space<vmem>>, %arg7: memref<1x128xf32, #tpu.memory_space<vmem>>, %arg8: memref<1x128xf32, #tpu.memory_space<vmem>>, %arg9: memref<1x1xf32, #tpu.memory_space<vmem>>, %arg10: memref<16x1xf32, #tpu.memory_space<vmem>>) attributes {dimension_semantics = [#tpu.dimension_semantics<parallel>], iteration_bounds = array<i64: 2>, scalar_prefetch = 0 : i64, scratch_operands = 0 : i64, tpu.core_type = #tpu.core_type<tc>, window_params = [{transform_indices = @transform_0, window_bounds = array<i64: 16, 3>}, {transform_indices = @transform_1, window_bounds = array<i64: 16, 4>}, {pipeline_mode = #tpu.pipeline_mode<synchronous>, transform_indices = @transform_2, window_bounds = array<i64: 24, 256>}, {pipeline_mode = #tpu.pipeline_mode<synchronous>, transform_indices = @transform_3, window_bounds = array<i64: 4, 256>}, {pipeline_mode = #tpu.pipeline_mode<synchronous>, transform_indices = @transform_4, window_bounds = array<i64: 1, 256>}, {pipeline_mode = #tpu.pipeline_mode<synchronous>, transform_indices = @transform_5, window_bounds = array<i64: 256, 128>}, {pipeline_mode = #tpu.pipeline_mode<synchronous>, transform_indices = @transform_6, window_bounds = array<i64: 1, 128>}, {pipeline_mode = #tpu.pipeline_mode<synchronous>, transform_indices = @transform_7, window_bounds = array<i64: 1, 128>}, {pipeline_mode = #tpu.pipeline_mode<synchronous>, transform_indices = @transform_8, window_bounds = array<i64: 1, 1>}, {transform_indices = @transform_9, window_bounds = array<i64: 16, 1>}]} {
    %0 = tpu.iota {dimensions = array<i32: 1>} : vector<16x24xi32>
    %c0 = arith.constant 0 : index
    %c0_0 = arith.constant 0 : index
    %1 = vector.load %arg1[%c0, %c0_0] : memref<16x3xi32, #tpu.memory_space<vmem>>, vector<16x1xi32>
    %2 = vector.broadcast %1 : vector<16x1xi32> to vector<16x24xi32>
    %3 = arith.cmpi eq, %2, %0 : vector<16x24xi32>
    %c0_1 = arith.constant 0 : index
    %c1 = arith.constant 1 : index
    %4 = vector.load %arg1[%c0_1, %c1] : memref<16x3xi32, #tpu.memory_space<vmem>>, vector<16x1xi32>
    %5 = vector.broadcast %4 : vector<16x1xi32> to vector<16x24xi32>
    %6 = arith.cmpi eq, %5, %0 : vector<16x24xi32>
    %7 = arith.ori %3, %6 : vector<16x24xi1>
    %c0_2 = arith.constant 0 : index
    %c2 = arith.constant 2 : index
    %8 = vector.load %arg1[%c0_2, %c2] : memref<16x3xi32, #tpu.memory_space<vmem>>, vector<16x1xi32>
    %9 = vector.broadcast %8 : vector<16x1xi32> to vector<16x24xi32>
    %10 = arith.cmpi eq, %9, %0 : vector<16x24xi32>
    %11 = arith.ori %7, %10 : vector<16x24xi1>
    %cst = arith.constant 1.000000e+00 : f32
    %cst_3 = arith.constant 0.000000e+00 : f32
    %12 = vector.broadcast %cst : f32 to vector<16x24xf32>
    %13 = vector.broadcast %cst_3 : f32 to vector<16x24xf32>
    %14 = arith.select %11, %12, %13 : vector<16x24xi1>, vector<16x24xf32>
    %15 = arith.truncf %14 : vector<16x24xf32> to vector<16x24xbf16>
    %c0_4 = arith.constant 0 : index
    %c0_5 = arith.constant 0 : index
    %16 = vector.load %arg3[%c0_4, %c0_5] : memref<24x256xbf16, #tpu.memory_space<vmem>>, vector<24x256xbf16>
    %cst_6 = arith.constant dense<0.000000e+00> : vector<16x256xf32>
    %17 = tpu.matmul %15, %16, %cst_6 {dimension_numbers = #tpu.dot_dimension_numbers<[1], [0], [0], [1], [0, 0, 1, 1], [], []>} : vector<16x24xbf16>, vector<24x256xbf16>, vector<16x256xf32> -> vector<16x256xf32>
    %c0_7 = arith.constant 0 : index
    %c0_8 = arith.constant 0 : index
    %18 = vector.load %arg2[%c0_7, %c0_8] : memref<16x4xbf16, #tpu.memory_space<vmem>>, vector<16x4xbf16>
    %c0_9 = arith.constant 0 : index
    %c0_10 = arith.constant 0 : index
    %19 = vector.load %arg4[%c0_9, %c0_10] : memref<4x256xbf16, #tpu.memory_space<vmem>>, vector<4x256xbf16>
    %cst_11 = arith.constant dense<0.000000e+00> : vector<16x256xf32>
    %20 = tpu.matmul %18, %19, %cst_11 {dimension_numbers = #tpu.dot_dimension_numbers<[1], [0], [0], [1], [0, 0, 1, 1], [], []>} : vector<16x4xbf16>, vector<4x256xbf16>, vector<16x256xf32> -> vector<16x256xf32>
    %21 = arith.addf %17, %20 : vector<16x256xf32>
    %c0_12 = arith.constant 0 : index
    %c0_13 = arith.constant 0 : index
    %22 = vector.load %arg5[%c0_12, %c0_13] : memref<1x256xf32, #tpu.memory_space<vmem>>, vector<1x256xf32>
    %23 = vector.broadcast %22 : vector<1x256xf32> to vector<16x256xf32>
    %24 = arith.addf %21, %23 : vector<16x256xf32>
    %cst_14 = arith.constant 0.000000e+00 : f32
    %25 = vector.broadcast %cst_14 : f32 to vector<16x256xf32>
    %26 = arith.maximumf %24, %25 : vector<16x256xf32>
    %27 = arith.truncf %26 : vector<16x256xf32> to vector<16x256xbf16>
    %c0_15 = arith.constant 0 : index
    %c0_16 = arith.constant 0 : index
    %28 = vector.load %arg6[%c0_15, %c0_16] : memref<256x128xbf16, #tpu.memory_space<vmem>>, vector<256x128xbf16>
    %cst_17 = arith.constant dense<0.000000e+00> : vector<16x128xf32>
    %29 = tpu.matmul %27, %28, %cst_17 {dimension_numbers = #tpu.dot_dimension_numbers<[1], [0], [0], [1], [0, 0, 1, 1], [], []>} : vector<16x256xbf16>, vector<256x128xbf16>, vector<16x128xf32> -> vector<16x128xf32>
    %c0_18 = arith.constant 0 : index
    %c0_19 = arith.constant 0 : index
    %30 = vector.load %arg7[%c0_18, %c0_19] : memref<1x128xf32, #tpu.memory_space<vmem>>, vector<1x128xf32>
    %31 = vector.broadcast %30 : vector<1x128xf32> to vector<16x128xf32>
    %32 = arith.addf %29, %31 : vector<16x128xf32>
    %cst_20 = arith.constant 0.000000e+00 : f32
    %33 = vector.broadcast %cst_20 : f32 to vector<16x128xf32>
    %34 = arith.maximumf %32, %33 : vector<16x128xf32>
    %c0_21 = arith.constant 0 : index
    %c0_22 = arith.constant 0 : index
    %35 = vector.load %arg8[%c0_21, %c0_22] : memref<1x128xf32, #tpu.memory_space<vmem>>, vector<1x128xf32>
    %36 = vector.broadcast %35 : vector<1x128xf32> to vector<16x128xf32>
    %37 = arith.mulf %34, %36 : vector<16x128xf32>
    %cst_23 = arith.constant dense<0.000000e+00> : vector<16xf32>
    %38 = vector.multi_reduction <add>, %37, %cst_23 [1] : vector<16x128xf32> to vector<16xf32>
    %39 = vector.shape_cast %38 : vector<16xf32> to vector<16x1xf32>
    %c0_24 = arith.constant 0 : index
    %c0_25 = arith.constant 0 : index
    %40 = vector.load %arg9[%c0_24, %c0_25] : memref<1x1xf32, #tpu.memory_space<vmem>>, vector<1x1xf32>
    %41 = vector.broadcast %40 : vector<1x1xf32> to vector<16x1xf32>
    %42 = arith.addf %39, %41 : vector<16x1xf32>
    %c0_26 = arith.constant 0 : index
    %c0_27 = arith.constant 0 : index
    %43 = vector.load %arg10[%c0_26, %c0_27] : memref<16x1xf32, #tpu.memory_space<vmem>>, vector<16x1xf32>
    tpu.vector_store %arg10[%c0_26, %c0_27], %42 {strides = array<i32>} : memref<16x1xf32, #tpu.memory_space<vmem>>, vector<16x1xf32>,
    return
  }
  func.func @transform_0(%arg0: i32) -> (i32, i32) {
    %c0_i32 = arith.constant 0 : i32
    %c0_i32_0 = arith.constant 0 : i32
    return %arg0, %c0_i32 : i32, i32
  }
  func.func @transform_1(%arg0: i32) -> (i32, i32) {
    %c0_i32 = arith.constant 0 : i32
    %c0_i32_0 = arith.constant 0 : i32
    return %arg0, %c0_i32 : i32, i32
  }
  func.func @transform_2(%arg0: i32) -> (i32, i32) {
    %c0_i32 = arith.constant 0 : i32
    %c0_i32_0 = arith.constant 0 : i32
    %c0_i32_1 = arith.constant 0 : i32
    return %c0_i32, %c0_i32_0 : i32, i32
  }
  func.func @transform_3(%arg0: i32) -> (i32, i32) {
    %c0_i32 = arith.constant 0 : i32
    %c0_i32_0 = arith.constant 0 : i32
    %c0_i32_1 = arith.constant 0 : i32
    return %c0_i32, %c0_i32_0 : i32, i32
  }
  func.func @transform_4(%arg0: i32) -> (i32, i32) {
    %c0_i32 = arith.constant 0 : i32
    %c0_i32_0 = arith.constant 0 : i32
    %c0_i32_1 = arith.constant 0 : i32
    return %c0_i32, %c0_i32_0 : i32, i32
  }
  func.func @transform_5(%arg0: i32) -> (i32, i32) {
    %c0_i32 = arith.constant 0 : i32
    %c0_i32_0 = arith.constant 0 : i32
    %c0_i32_1 = arith.constant 0 : i32
    return %c0_i32, %c0_i32_0 : i32, i32
  }
  func.func @transform_6(%arg0: i32) -> (i32, i32) {
    %c0_i32 = arith.constant 0 : i32
    %c0_i32_0 = arith.constant 0 : i32
    %c0_i32_1 = arith.constant 0 : i32
    return %c0_i32, %c0_i32_0 : i32, i32
  }
  func.func @transform_7(%arg0: i32) -> (i32, i32) {
    %c0_i32 = arith.constant 0 : i32
    %c0_i32_0 = arith.constant 0 : i32
    %c0_i32_1 = arith.constant 0 : i32
    return %c0_i32, %c0_i32_0 : i32, i32
  }
  func.func @transform_8(%arg0: i32) -> (i32, i32) {
    %c0_i32 = arith.constant 0 : i32
    %c0_i32_0 = arith.constant 0 : i32
    %c0_i32_1 = arith.constant 0 : i32
    return %c0_i32, %c0_i32_0 : i32, i32
  }
  func.func @transform_9(%arg0: i32) -> (i32, i32) {
    %c0_i32 = arith.constant 0 : i32
    %c0_i32_0 = arith.constant 0 : i32
    return %arg0, %c0_i32 : i32, i32
  }
}

</mosaic_0001>

<llo_original>
// kernel: ff_model_forward.1
$region0: #{ff_model_forward.1}
  #allocation0 [shape = 'u32[]', space=smem, size = 0x4, offset = 0x4, fixed_abs, tag = 'smem constant byte address 0x4 - core index']
  #allocation1 [shape = 'u32[144,128]{1,0:T(1,128)}', space=vmem, size = 0x12000, scoped, tag = 'internal scratch']
  #allocation2 [shape = 'f32[1,1]{1,0:T(1,128)S(1)}', space=vmem, size = 0x200, scoped, tag = 'scoped memory for ff_model_forward.1']
  %s0 = inlined_call_operand.vmem [shape: s32[32,3], index: 0, kind: input, shape index: {}]
  %s1 = inlined_call_operand.vmem [shape: bf16[32,4], index: 1, kind: input, shape index: {}]
  %s2 = inlined_call_operand.vmem [shape: bf16[24,256], index: 2, kind: input, shape index: {}]
  %s3 = inlined_call_operand.vmem [shape: bf16[4,256], index: 3, kind: input, shape index: {}]
  %s4 = inlined_call_operand.vmem [shape: f32[1,256], index: 4, kind: input, shape index: {}]
  %s5 = inlined_call_operand.vmem [shape: bf16[256,128], index: 5, kind: input, shape index: {}]
  %s6 = inlined_call_operand.vmem [shape: f32[1,128], index: 6, kind: input, shape index: {}]
  %s7 = inlined_call_operand.vmem [shape: f32[1,128], index: 7, kind: input, shape index: {}]
  %s8 = inlined_call_operand.<no memory space> [shape: f32[1,1], index: 8, kind: input, shape index: {}]
  %s9 = inlined_call_operand.vmem [shape: f32[32,1], index: 9, kind: output, shape index: {}]
  %s10 = sld [smem:[#allocation0]]
  $region69: #{ff_model_forward.1} parent=0
    _
  %s12 = ssub.s32 1, %s10
  %s13 = scalar_select 0, %s12, %s10
  %v14 = vstv %s8
  %15 = vst [vmem:[#allocation2] sm:$0x1] %v14
  loop: start=0, step=1, limit=4
  $region2: #{ff_model_forward.1} parent=0 // loop_pre_header
    _
  $region3: #{ff_model_forward.1} parent=0 // loop_header
    %s17 = sphi 0, %s21
    %p18 = scmp.ge.s32.totalorder %s17, 4
    %s27 = sphi 0, %s29
    %s30 = sphi 0, %s27
    %s31 = sphi 0, %s30
    %s47 = sphi 0, %s31
    %s53 = sphi 0, %s55
    %s56 = sphi 0, %s53
    %s57 = sphi 0, %s56
    %s73 = sphi 0, %s57
    %s77 = sphi 0, %s77
    %s79 = sphi 0, %s77
    %s80 = sphi 0, %s79
    %s94 = sphi 0, %s80
    %s98 = sphi 0, %s98
    %s100 = sphi 0, %s98
    %s101 = sphi 0, %s100
    %s115 = sphi 0, %s101
    %s119 = sphi 0, %s119
    %s121 = sphi 0, %s119
    %s122 = sphi 0, %s121
    %s136 = sphi 0, %s122
    %s140 = sphi 0, %s140
    %s142 = sphi 0, %s140
    %s143 = sphi 0, %s142
    %s157 = sphi 0, %s143
    %s161 = sphi 0, %s161
    %s163 = sphi 0, %s161
    %s164 = sphi 0, %s163
    %s178 = sphi 0, %s164
    %s182 = sphi 0, %s182
    %s184 = sphi 0, %s182
    %s185 = sphi 0, %s184
    %s199 = sphi 0, %s185
    %s203 = sphi 0, %s203
    %s205 = sphi 0, %s203
    %s206 = sphi 0, %s205
    %s220 = sphi 0, %s206
    %s226 = sphi 0, %s228
    %s229 = sphi 0, %s226
    %s230 = sphi 0, %s229
    %s246 = sphi 0, %s230
  $region4: #{ff_model_forward.1} parent=0 // loop_header_branch
    %20 = sbr.rel (%p18) target = $region8
  $region5: #{ff_model_forward.1} parent=0 // loop_body
    %s22 = ssub.s32 %s17, 1
    %s23 = ssub.s32 %s17, 2
    %s24 = sadd.s32 %s17, 1
    %s25 = ssub.s32 %s17, %s24
    %p26 = scmp.eq.s32.totalorder %s25, 0
    %s28 = sadd.s32 %s27, 1
    %s29 = scalar_select %p26, %s27, %s28
    %p32 = pneg %p26
    %p33 = scmp.eq.s32.totalorder %s17, 1
    %p34 = por %p32, %p33
    %p35 = scmp.ne.s32.totalorder %s27, %s30
    %p36 = scmp.eq.s32.totalorder %s17, 0
    %p37 = por %p35, %p36
    %p38 = scmp.ne.s32.totalorder %s27, %s30
    %p39 = scmp.eq.s32.totalorder %s22, 1
    %p40 = por %p38, %p39
    %p41 = scmp.ne.s32.totalorder %s30, %s31
    %p42 = scmp.eq.s32.totalorder %s22, 0
    %p43 = por %p41, %p42
    %p44 = scmp.ne.s32.totalorder %s30, %s31
    %p45 = scmp.eq.s32.totalorder %s23, 1
    %p46 = por %p44, %p45
    %p48 = scmp.ne.s32.totalorder %s31, %s47
    %p49 = scmp.eq.s32.totalorder %s23, 0
    %p50 = por %p48, %p49
    %s51 = ssub.s32 %s17, %s24
    %p52 = scmp.eq.s32.totalorder %s51, 0
    %s54 = sadd.s32 %s53, 1
    %s55 = scalar_select %p52, %s53, %s54
    %p58 = pneg %p52
    %p59 = scmp.eq.s32.totalorder %s17, 1
    %p60 = por %p58, %p59
    %p61 = scmp.ne.s32.totalorder %s53, %s56
    %p62 = scmp.eq.s32.totalorder %s17, 0
    %p63 = por %p61, %p62
    %p64 = scmp.ne.s32.totalorder %s53, %s56
    %p65 = scmp.eq.s32.totalorder %s22, 1
    %p66 = por %p64, %p65
    %p67 = scmp.ne.s32.totalorder %s56, %s57
    %p68 = scmp.eq.s32.totalorder %s22, 0
    %p69 = por %p67, %p68
    %p70 = scmp.ne.s32.totalorder %s56, %s57
    %p71 = scmp.eq.s32.totalorder %s23, 1
    %p72 = por %p70, %p71
    %p74 = scmp.ne.s32.totalorder %s57, %s73
    %p75 = scmp.eq.s32.totalorder %s23, 0
    %p76 = por %p74, %p75
    %s78 = sadd.s32 %s77, 1
    %p81 = scmp.eq.s32.totalorder %s17, 1
    %p82 = scmp.ne.s32.totalorder %s77, %s79
    %p83 = scmp.eq.s32.totalorder %s17, 0
    %p84 = por %p82, %p83
    %p85 = scmp.ne.s32.totalorder %s77, %s79
    %p86 = scmp.eq.s32.totalorder %s22, 1
    %p87 = por %p85, %p86
    %p88 = scmp.ne.s32.totalorder %s79, %s80
    %p89 = scmp.eq.s32.totalorder %s22, 0
    %p90 = por %p88, %p89
    %p91 = scmp.ne.s32.totalorder %s79, %s80
    %p92 = scmp.eq.s32.totalorder %s23, 1
    %p93 = por %p91, %p92
    %p95 = scmp.ne.s32.totalorder %s80, %s94
    %p96 = scmp.eq.s32.totalorder %s23, 0
    %p97 = por %p95, %p96
    %s99 = sadd.s32 %s98, 1
    %p102 = scmp.eq.s32.totalorder %s17, 1
    %p103 = scmp.ne.s32.totalorder %s98, %s100
    %p104 = scmp.eq.s32.totalorder %s17, 0
    %p105 = por %p103, %p104
    %p106 = scmp.ne.s32.totalorder %s98, %s100
    %p107 = scmp.eq.s32.totalorder %s22, 1
    %p108 = por %p106, %p107
    %p109 = scmp.ne.s32.totalorder %s100, %s101
    %p110 = scmp.eq.s32.totalorder %s22, 0
    %p111 = por %p109, %p110
    %p112 = scmp.ne.s32.totalorder %s100, %s101
    %p113 = scmp.eq.s32.totalorder %s23, 1
    %p114 = por %p112, %p113
    %p116 = scmp.ne.s32.totalorder %s101, %s115
    %p117 = scmp.eq.s32.totalorder %s23, 0
    %p118 = por %p116, %p117
    %s120 = sadd.s32 %s119, 1
    %p123 = scmp.eq.s32.totalorder %s17, 1
    %p124 = scmp.ne.s32.totalorder %s119, %s121
    %p125 = scmp.eq.s32.totalorder %s17, 0
    %p126 = por %p124, %p125
    %p127 = scmp.ne.s32.totalorder %s119, %s121
    %p128 = scmp.eq.s32.totalorder %s22, 1
    %p129 = por %p127, %p128
    %p130 = scmp.ne.s32.totalorder %s121, %s122
    %p131 = scmp.eq.s32.totalorder %s22, 0
    %p132 = por %p130, %p131
    %p133 = scmp.ne.s32.totalorder %s121, %s122
    %p134 = scmp.eq.s32.totalorder %s23, 1
    %p135 = por %p133, %p134
    %p137 = scmp.ne.s32.totalorder %s122, %s136
    %p138 = scmp.eq.s32.totalorder %s23, 0
    %p139 = por %p137, %p138
    %s141 = sadd.s32 %s140, 1
    %p144 = scmp.eq.s32.totalorder %s17, 1
    %p145 = scmp.ne.s32.totalorder %s140, %s142
    %p146 = scmp.eq.s32.totalorder %s17, 0
    %p147 = por %p145, %p146
    %p148 = scmp.ne.s32.totalorder %s140, %s142
    %p149 = scmp.eq.s32.totalorder %s22, 1
    %p150 = por %p148, %p149
    %p151 = scmp.ne.s32.totalorder %s142, %s143
    %p152 = scmp.eq.s32.totalorder %s22, 0
    %p153 = por %p151, %p152
    %p154 = scmp.ne.s32.totalorder %s142, %s143
    %p155 = scmp.eq.s32.totalorder %s23, 1
    %p156 = por %p154, %p155
    %p158 = scmp.ne.s32.totalorder %s143, %s157
    %p159 = scmp.eq.s32.totalorder %s23, 0
    %p160 = por %p158, %p159
    %s162 = sadd.s32 %s161, 1
    %p165 = scmp.eq.s32.totalorder %s17, 1
    %p166 = scmp.ne.s32.totalorder %s161, %s163
    %p167 = scmp.eq.s32.totalorder %s17, 0
    %p168 = por %p166, %p167
    %p169 = scmp.ne.s32.totalorder %s161, %s163
    %p170 = scmp.eq.s32.totalorder %s22, 1
    %p171 = por %p169, %p170
    %p172 = scmp.ne.s32.totalorder %s163, %s164
    %p173 = scmp.eq.s32.totalorder %s22, 0
    %p174 = por %p172, %p173
    %p175 = scmp.ne.s32.totalorder %s163, %s164
    %p176 = scmp.eq.s32.totalorder %s23, 1
    %p177 = por %p175, %p176
    %p179 = scmp.ne.s32.totalorder %s164, %s178
    %p180 = scmp.eq.s32.totalorder %s23, 0
    %p181 = por %p179, %p180
    %s183 = sadd.s32 %s182, 1
    %p186 = scmp.eq.s32.totalorder %s17, 1
    %p187 = scmp.ne.s32.totalorder %s182, %s184
    %p188 = scmp.eq.s32.totalorder %s17, 0
    %p189 = por %p187, %p188
    %p190 = scmp.ne.s32.totalorder %s182, %s184
    %p191 = scmp.eq.s32.totalorder %s22, 1
    %p192 = por %p190, %p191
    %p193 = scmp.ne.s32.totalorder %s184, %s185
    %p194 = scmp.eq.s32.totalorder %s22, 0
    %p195 = por %p193, %p194
    %p196 = scmp.ne.s32.totalorder %s184, %s185
    %p197 = scmp.eq.s32.totalorder %s23, 1
    %p198 = por %p196, %p197
    %p200 = scmp.ne.s32.totalorder %s185, %s199
    %p201 = scmp.eq.s32.totalorder %s23, 0
    %p202 = por %p200, %p201
    %s204 = sadd.s32 %s203, 1
    %p207 = scmp.eq.s32.totalorder %s17, 1
    %p208 = scmp.ne.s32.totalorder %s203, %s205
    %p209 = scmp.eq.s32.totalorder %s17, 0
    %p210 = por %p208, %p209
    %p211 = scmp.ne.s32.totalorder %s203, %s205
    %p212 = scmp.eq.s32.totalorder %s22, 1
    %p213 = por %p211, %p212
    %p214 = scmp.ne.s32.totalorder %s205, %s206
    %p215 = scmp.eq.s32.totalorder %s22, 0
    %p216 = por %p214, %p215
    %p217 = scmp.ne.s32.totalorder %s205, %s206
    %p218 = scmp.eq.s32.totalorder %s23, 1
    %p219 = por %p217, %p218
    %p221 = scmp.ne.s32.totalorder %s206, %s220
    %p222 = scmp.eq.s32.totalorder %s23, 0
    %p223 = por %p221, %p222
    %s224 = ssub.s32 %s17, %s24
    %p225 = scmp.eq.s32.totalorder %s224, 0
    %s227 = sadd.s32 %s226, 1
    %s228 = scalar_select %p225, %s226, %s227
    %p231 = pneg %p225
    %p232 = scmp.eq.s32.totalorder %s17, 1
    %p233 = por %p231, %p232
    %p234 = scmp.ne.s32.totalorder %s226, %s229
    %p235 = scmp.eq.s32.totalorder %s17, 0
    %p236 = por %p234, %p235
    %p237 = scmp.ne.s32.totalorder %s226, %s229
    %p238 = scmp.eq.s32.totalorder %s22, 1
    %p239 = por %p237, %p238
    %p240 = scmp.ne.s32.totalorder %s229, %s230
    %p241 = scmp.eq.s32.totalorder %s22, 0
    %p242 = por %p240, %p241
    %p243 = scmp.ne.s32.totalorder %s229, %s230
    %p244 = scmp.eq.s32.totalorder %s23, 1
    %p245 = por %p243, %p244
    %p247 = scmp.ne.s32.totalorder %s230, %s246
    %p248 = scmp.eq.s32.totalorder %s23, 0
    %p249 = por %p247, %p248
    %p250 = scmp.le.s32.totalorder 1, %s17
    %p251 = scmp.lt.s32.totalorder %s17, 3
    %p252 = pnand %p250, %p251
    %p253 = pneg %p252
    // Predicated region
    $region9: #{ff_model_forward.1} parent=5 // pred_check
      _
    $region10: #{ff_model_forward.1} parent=5 // pred_check_branch
      %255 = sbr.rel (%p252) target = $region12
    $region11: #{ff_model_forward.1} parent=5 // pred_region
      %s256 = ssub.s32 %s17, 1
      // Predicated region
      $region13: #{ff_model_forward.1} parent=11 // pred_check
        %p257 = pneg %p90
      $region14: #{ff_model_forward.1} parent=11 // pred_check_branch
        %259 = sbr.rel (%p257) target = $region16
      $region15: #{ff_model_forward.1} parent=11 // pred_region
        _
      $region16: #{ff_model_forward.1} parent=11 // pred_fallthru
        _
      // Predicated region
      $region17: #{ff_model_forward.1} parent=11 // pred_check
        %p260 = pneg %p111
      $region18: #{ff_model_forward.1} parent=11 // pred_check_branch
        %262 = sbr.rel (%p260) target = $region20
      $region19: #{ff_model_forward.1} parent=11 // pred_region
        _
      $region20: #{ff_model_forward.1} parent=11 // pred_fallthru
        _
      // Predicated region
      $region21: #{ff_model_forward.1} parent=11 // pred_check
        %p263 = pneg %p132
      $region22: #{ff_model_forward.1} parent=11 // pred_check_branch
        %265 = sbr.rel (%p263) target = $region24
      $region23: #{ff_model_forward.1} parent=11 // pred_region
        _
      $region24: #{ff_model_forward.1} parent=11 // pred_fallthru
        _
      // Predicated region
      $region25: #{ff_model_forward.1} parent=11 // pred_check
        %p266 = pneg %p153
      $region26: #{ff_model_forward.1} parent=11 // pred_check_branch
        %268 = sbr.rel (%p266) target = $region28
      $region27: #{ff_model_forward.1} parent=11 // pred_region
        _
      $region28: #{ff_model_forward.1} parent=11 // pred_fallthru
        _
      // Predicated region
      $region29: #{ff_model_forward.1} parent=11 // pred_check
        %p269 = pneg %p174
      $region30: #{ff_model_forward.1} parent=11 // pred_check_branch
        %271 = sbr.rel (%p269) target = $region32
      $region31: #{ff_model_forward.1} parent=11 // pred_region
        _
      $region32: #{ff_model_forward.1} parent=11 // pred_fallthru
        _
      // Predicated region
      $region33: #{ff_model_forward.1} parent=11 // pred_check
        %p272 = pneg %p195
      $region34: #{ff_model_forward.1} parent=11 // pred_check_branch
        %274 = sbr.rel (%p272) target = $region36
      $region35: #{ff_model_forward.1} parent=11 // pred_region
        _
      $region36: #{ff_model_forward.1} parent=11 // pred_fallthru
        _
      // Predicated region
      $region37: #{ff_model_forward.1} parent=11 // pred_check
        %p275 = pneg %p216
      $region38: #{ff_model_forward.1} parent=11 // pred_check_branch
        %277 = sbr.rel (%p275) target = $region40
      $region39: #{ff_model_forward.1} parent=11 // pred_region
        _
      $region40: #{ff_model_forward.1} parent=11 // pred_fallthru
        _
    $region12: #{ff_model_forward.1} parent=5 // pred_fallthru
      _
    %p278 = scmp.lt.s32.totalorder %s17, 2
    // Predicated region
    $region41: #{ff_model_forward.1} parent=5 // pred_check
      %p279 = pneg %p278
    $region42: #{ff_model_forward.1} parent=5 // pred_check_branch
      %281 = sbr.rel (%p279) target = $region44
    $region43: #{ff_model_forward.1} parent=5 // pred_region
      // Predicated region
      $region45: #{ff_model_forward.1} parent=43 // pred_check
        %p282 = pneg %p37
      $region46: #{ff_model_forward.1} parent=43 // pred_check_branch
        %284 = sbr.rel (%p282) target = $region48
      $region47: #{ff_model_forward.1} parent=43 // pred_region
        %s285 = smul.u32 2, %s17
        %p286 = scmp.lt.s32.totalorder %s285, 3
        %s287 = scalar_select %p286, %s285, 3
        %s288 = smul.addr %s287, 8
        %s289 = scalar_lea.vmem %s0, %s288
        %s290 = smul.u32 2, %s17
      $region48: #{ff_model_forward.1} parent=43 // pred_fallthru
        _
      // Predicated region
      $region49: #{ff_model_forward.1} parent=43 // pred_check
        %p291 = pneg %p63
      $region50: #{ff_model_forward.1} parent=43 // pred_check_branch
        %293 = sbr.rel (%p291) target = $region52
      $region51: #{ff_model_forward.1} parent=43 // pred_region
        %s294 = smul.u32 2, %s17
        %p295 = scmp.lt.s32.totalorder %s294, 3
        %s296 = scalar_select %p295, %s294, 3
        %s297 = smul.addr %s296, 4
        %s298 = scalar_lea.vmem %s1, %s297
        %s299 = smul.u32 2, %s17
      $region52: #{ff_model_forward.1} parent=43 // pred_fallthru
        _
    $region44: #{ff_model_forward.1} parent=5 // pred_fallthru
      _
    %p300 = scmp.le.s32.totalorder 1, %s17
    %p301 = scmp.lt.s32.totalorder %s17, 3
    %p302 = pnand %p300, %p301
    %p303 = pneg %p302
    // Predicated region
    $region53: #{ff_model_forward.1} parent=5 // pred_check
      _
    $region54: #{ff_model_forward.1} parent=5 // pred_check_branch
      %305 = sbr.rel (%p302) target = $region56
    $region55: #{ff_model_forward.1} parent=5 // pred_region
      %s306 = ssub.s32 %s17, 1
      %s307 = smul.u32 2, %s22
      %p308 = scmp.lt.s32.totalorder %s307, 3
      %s309 = scalar_select %p308, %s307, 3
      %s310 = smul.addr %s309, 8
      %s311 = scalar_lea.vmem %s0, %s310
      %p312 = pneg %p43
      %p313 = pneg %p40
      %s314 = smul.u32 2, %s22
      %p315 = scmp.lt.s32.totalorder %s314, 3
      %s316 = scalar_select %p315, %s314, 3
      %s317 = smul.addr %s316, 4
      %s318 = scalar_lea.vmem %s1, %s317
      %p319 = pneg %p69
      %p320 = pneg %p66
      %p321 = pneg %p90
      %p322 = pneg %p87
      %p323 = pneg %p111
      %p324 = pneg %p108
      %p325 = pneg %p132
      %p326 = pneg %p129
      %p327 = pneg %p153
      %p328 = pneg %p150
      %p329 = pneg %p174
      %p330 = pneg %p171
      %p331 = pneg %p195
      %p332 = pneg %p192
      %p333 = pneg %p216
      %p334 = pneg %p213
      %p335 = pneg %p242
      %p336 = pneg %p239
      %s337 = smul.u32 2, %s22
      %p338 = scmp.lt.s32.totalorder %s337, 3
      %s339 = scalar_select %p338, %s337, 3
      %s340 = smul.addr %s339, 8
      %s341 = scalar_lea.vmem %s9, %s340
      %s342 = smul.u32 2, %s22
      %p343 = scmp.lt.s32.totalorder %s342, 3
      %s344 = scalar_select %p343, %s342, 3
      %s345 = smul.addr %s344, 8
      %s346 = scalar_lea.vmem %s0, %s345
      %s347 = smul.u32 2, %s22
      %s348 = smul.u32 2, %s22
      %p349 = scmp.lt.s32.totalorder %s348, 3
      %s350 = scalar_select %p349, %s348, 3
      %s351 = smul.addr %s350, 4
      %s352 = scalar_lea.vmem %s1, %s351
      %s353 = smul.u32 2, %s22
      %s354 = smul.u32 2, %s22
      %p355 = scmp.lt.s32.totalorder %s354, 3
      %s356 = scalar_select %p355, %s354, 3
      %s357 = smul.addr %s356, 8
      %s358 = scalar_lea.vmem %s9, %s357
      %s359 = smul.u32 2, %s22
      %v361 = vlaneseq
      %v362 = vand.u32 %v361, 127
      %v363 = vld [vmem:[%s346] sm:$0xff]
      %v364 = vld [vmem:[%s346 + $0x8] sm:$0xff]
      %365 = vset.pattern.permute.xlu0 0
      %366 = vperm.xlu0 %365, %v363
      %v367 = vpop.permute.xlu0 %366
      %368 = vset.pattern.permute.xlu0 0
      %369 = vperm.xlu0 %368, %v364
      %v370 = vpop.permute.xlu0 %369
      %vm371 = vcmp.eq.s32.totalorder %v367, %v362
      %vm372 = vcmp.eq.s32.totalorder %v370, %v362
      %373 = vset.pattern.permute.xlu0 1
      %374 = vperm.xlu0 %373, %v363
      %v375 = vpop.permute.xlu0 %374
      %376 = vset.pattern.permute.xlu0 1
      %377 = vperm.xlu0 %376, %v364
      %v378 = vpop.permute.xlu0 %377
      %vm379 = vcmp.eq.s32.totalorder %v375, %v362
      %vm380 = vcmp.eq.s32.totalorder %v378, %v362
      %vm381 = vmor %vm371, %vm379
      %vm382 = vmor %vm372, %vm380
      %383 = vset.pattern.permute.xlu0 2
      %384 = vperm.xlu0 %383, %v363
      %v385 = vpop.permute.xlu0 %384
      %386 = vset.pattern.permute.xlu0 2
      %387 = vperm.xlu0 %386, %v364
      %v388 = vpop.permute.xlu0 %387
      %vm389 = vcmp.eq.s32.totalorder %v385, %v362
      %vm390 = vcmp.eq.s32.totalorder %v388, %v362
      %vm391 = vmor %vm381, %vm389
      %vm392 = vmor %vm382, %vm390
      %v393 = vsel %vm391, 1.0, 0.0
      %v394 = vsel %vm392, 1.0, 0.0
      %v395 = vpack.c.bf16 %v394, %v393
      %v396 = vld [vmem:[%s2] sm:$0xff]
      %v397 = vld [vmem:[%s2 + $0x8] sm:$0xff]
      %v398 = vld [vmem:[%s2 + $0x10] sm:$0xff]
      %v399 = vld [vmem:[%s352] sm:$0xf]
      %v400 = vld [vmem:[%s352 + $0x4] sm:$0xf]
      %v401 = vld [vmem:[%s3] sm:$0xf]
      %v404 = vunpack.c.l.b16 %v399
      %v405 = vunpack.c.l.b16 %v400
      %v406 = vpack.c.b16 %v405, %v404
      %v409 = vunpack.c.l.s4 1983009808
      %v410 = vunpack.c.0.s8 %v409
      %v411 = vlaneseq
      %v412 = vshrl.u32 %v411, 7
      %v413 = vsub.s32 %v410, %v412
      %v414 = vrot.slane %v401, %v413
      %v415 = vcombine.high %v414, %v414
      %vm416 = vcmask 31744
      %v418 = vsel %vm416, %v406, 0
      %vm420 = vcmask 1041408
      %v422 = vsel %vm420, %v414, 0
      %v425 = vsel %vm420, %v415, 0
      %427 = vmatprep.subr.bf16.mxu0 %v425
      %428 = vmatpush1.bf16.msra.mxu0 %v422
      %429 = vmatprep.subr.bf16.mxu0 0
      %430 = vmatpush1.bf16.msra.mxu0 0
      %431 = vmatprep.subr.bf16.mxu0 0
      %432 = vmatpush1.bf16.msra.mxu0 0
      %433 = vmatprep.subr.bf16.mxu0 0
      %434 = vmatpush1.bf16.msra.mxu0 0
      %435 = vmatprep.subr.bf16.mxu0 0
      %436 = vmatpush1.bf16.msra.mxu0 0
      %437 = vmatprep.subr.bf16.mxu0 0
      %438 = vmatpush1.bf16.msra.mxu0 0
      %439 = vmatprep.subr.bf16.mxu0 0
      %440 = vmatpush1.bf16.msra.mxu0 0
      %441 = vmatprep.subr.bf16.mxu0 0
      %442 = vmatpush1.bf16.msra.mxu0 0
      %443 = vmatprep.subr.bf16.mxu0 0
      %444 = vmatpush1.bf16.msra.mxu0 0
      %445 = vmatprep.subr.bf16.mxu0 0
      %446 = vmatpush1.bf16.msra.mxu0 0
      %447 = vmatprep.subr.bf16.mxu0 0
      %448 = vmatpush1.bf16.msra.mxu0 0
      %449 = vmatprep.subr.bf16.mxu0 0
      %450 = vmatpush1.bf16.msra.mxu0 0
      %451 = vmatprep.subr.bf16.mxu0 0
      %452 = vmatpush1.bf16.msra.mxu0 0
      %453 = vmatprep.subr.bf16.mxu0 0
      %454 = vmatpush1.bf16.msra.mxu0 0
      %455 = vmatprep.subr.bf16.mxu0 0
      %456 = vmatpush1.bf16.msra.mxu0 0
      %457 = vmatprep.subr.bf16.mxu0 0
      %458 = vmatpush1.bf16.msra.mxu0 0
      %459 = vmatprep.mubr.bf16.mxu0 0
      %460 = vmatmul.mubr.bf16.gmra.mrb[0].mxu0 %v418
      %v461 = vpop.f32.mrb[0].mxu0
      %v462 = vadd.f32 0.0, %v461
      %v463 = vpop.f32.mrb[0].mxu0
      %v464 = vadd.f32 0.0, %v463
      %v465 = vpop.f32.mrb[0].mxu0
      %v466 = vadd.f32 0.0, %v465
      %v467 = vpop.f32.mrb[0].mxu0
      %v468 = vadd.f32 0.0, %v467
      %469 = vdwg.mxu0
      %v473 = vunpack.c.l.b16 %v396
      %v474 = vunpack.c.h.b16 %v396
      %v475 = vunpack.c.l.b16 %v397
      %v476 = vunpack.c.h.b16 %v397
      %v477 = vunpack.c.l.b16 %v398
      %v478 = vunpack.c.h.b16 %v398
      %v479 = vpack.c.b16 %v475, %v473
      %v480 = vpack.c.b16 %v476, %v474
      %v481 = vpack.c.b16 %v477, %v477
      %v482 = vpack.c.b16 %v478, %v478
      %vm485 = vcmask 195584
      %v487 = vsel %vm485, %v395, 0
      %vm489 = vcmask 1043456
      %v491 = vsel %vm489, %v481, 0
      %v494 = vsel %vm489, %v482, 0
      %496 = vmatprep.subr.bf16.mxu0 %v480
      %497 = vmatpush1.bf16.msra.mxu0 %v479
      %498 = vmatprep.subr.bf16.mxu0 %v494
      %499 = vmatpush1.bf16.msra.mxu0 %v491
      %500 = vmatprep.subr.bf16.mxu0 0
      %501 = vmatpush1.bf16.msra.mxu0 0
      %502 = vmatprep.subr.bf16.mxu0 0
      %503 = vmatpush1.bf16.msra.mxu0 0
      %504 = vmatprep.subr.bf16.mxu0 0
      %505 = vmatpush1.bf16.msra.mxu0 0
      %506 = vmatprep.subr.bf16.mxu0 0
      %507 = vmatpush1.bf16.msra.mxu0 0
      %508 = vmatprep.subr.bf16.mxu0 0
      %509 = vmatpush1.bf16.msra.mxu0 0
      %510 = vmatprep.subr.bf16.mxu0 0
      %511 = vmatpush1.bf16.msra.mxu0 0
      %512 = vmatprep.subr.bf16.mxu0 0
      %513 = vmatpush1.bf16.msra.mxu0 0
      %514 = vmatprep.subr.bf16.mxu0 0
      %515 = vmatpush1.bf16.msra.mxu0 0
      %516 = vmatprep.subr.bf16.mxu0 0
      %517 = vmatpush1.bf16.msra.mxu0 0
      %518 = vmatprep.subr.bf16.mxu0 0
      %519 = vmatpush1.bf16.msra.mxu0 0
      %520 = vmatprep.subr.bf16.mxu0 0
      %521 = vmatpush1.bf16.msra.mxu0 0
      %522 = vmatprep.subr.bf16.mxu0 0
      %523 = vmatpush1.bf16.msra.mxu0 0
      %524 = vmatprep.subr.bf16.mxu0 0
      %525 = vmatpush1.bf16.msra.mxu0 0
      %526 = vmatprep.subr.bf16.mxu0 0
      %527 = vmatpush1.bf16.msra.mxu0 0
      %528 = vmatprep.mubr.bf16.mxu0 0
      %529 = vmatmul.mubr.bf16.gmra.mrb[0].mxu0 %v487
      %v530 = vpop.f32.mrb[0].mxu0
      %v531 = vadd.f32 %v462, %v530
      %v532 = vpop.f32.mrb[0].mxu0
      %v533 = vadd.f32 %v464, %v532
      %v534 = vpop.f32.mrb[0].mxu0
      %v535 = vadd.f32 %v466, %v534
      %v536 = vpop.f32.mrb[0].mxu0
      %v537 = vadd.f32 %v468, %v536
      %538 = vdwg.mxu0
      %v539 = vld [vmem:[%s4] sm:$0x3]
      %v541 = vlaneseq
      %v542 = vshrl.u32 %v541, 7
      %v543 = vsub.s32 0, %v542
      %v544 = vrot.slane %v539, %v543
      %v545 = vlaneseq
      %v546 = vshrl.u32 %v545, 7
      %v547 = vsub.s32 1, %v546
      %v548 = vrot.slane %v539, %v547
      %v551 = vadd.f32 %v531, %v544
      %v552 = vadd.f32 %v533, %v548
      %v553 = vadd.f32 %v535, %v544
      %v554 = vadd.f32 %v537, %v548
      %v555 = vmax.f32 %v551, 0.0
      %v556 = vmax.f32 %v552, 0.0
      %v557 = vmax.f32 %v553, 0.0
      %v558 = vmax.f32 %v554, 0.0
      %v559 = vpack.c.bf16 %v557, %v555
      %v560 = vpack.c.bf16 %v558, %v556
      %v561 = vld [vmem:[%s5] sm:$0xf]
      %v562 = vld [vmem:[%s5 + $0x4] sm:$0xf]
      %v563 = vld [vmem:[%s5 + $0x8] sm:$0xf]
      %v564 = vld [vmem:[%s5 + $0xc] sm:$0xf]
      %v565 = vld [vmem:[%s5 + $0x10] sm:$0xf]
      %v566 = vld [vmem:[%s5 + $0x14] sm:$0xf]
      %v567 = vld [vmem:[%s5 + $0x18] sm:$0xf]
      %v568 = vld [vmem:[%s5 + $0x1c] sm:$0xf]
      %v569 = vld [vmem:[%s5 + $0x20] sm:$0xf]
      %v570 = vld [vmem:[%s5 + $0x24] sm:$0xf]
      %v571 = vld [vmem:[%s5 + $0x28] sm:$0xf]
      %v572 = vld [vmem:[%s5 + $0x2c] sm:$0xf]
      %v573 = vld [vmem:[%s5 + $0x30] sm:$0xf]
      %v574 = vld [vmem:[%s5 + $0x34] sm:$0xf]
      %v575 = vld [vmem:[%s5 + $0x38] sm:$0xf]
      %v576 = vld [vmem:[%s5 + $0x3c] sm:$0xf]
      %v577 = vld [vmem:[%s5 + $0x40] sm:$0xf]
      %v578 = vld [vmem:[%s5 + $0x44] sm:$0xf]
      %v579 = vld [vmem:[%s5 + $0x48] sm:$0xf]
      %v580 = vld [vmem:[%s5 + $0x4c] sm:$0xf]
      %v581 = vld [vmem:[%s5 + $0x50] sm:$0xf]
      %v582 = vld [vmem:[%s5 + $0x54] sm:$0xf]
      %v583 = vld [vmem:[%s5 + $0x58] sm:$0xf]
      %v584 = vld [vmem:[%s5 + $0x5c] sm:$0xf]
      %v585 = vld [vmem:[%s5 + $0x60] sm:$0xf]
      %v586 = vld [vmem:[%s5 + $0x64] sm:$0xf]
      %v587 = vld [vmem:[%s5 + $0x68] sm:$0xf]
      %v588 = vld [vmem:[%s5 + $0x6c] sm:$0xf]
      %v589 = vld [vmem:[%s5 + $0x70] sm:$0xf]
      %v590 = vld [vmem:[%s5 + $0x74] sm:$0xf]
      %v591 = vld [vmem:[%s5 + $0x78] sm:$0xf]
      %v592 = vld [vmem:[%s5 + $0x7c] sm:$0xf]
      %v593 = vld [vmem:[%s6] sm:$0x1]
      %v595 = vlaneseq
      %v596 = vshrl.u32 %v595, 7
      %v597 = vsub.s32 0, %v596
      %v598 = vrot.slane %v593, %v597
      %v632 = vunpack.c.l.b16 %v561
      %v633 = vunpack.c.l.b16 %v562
      %v634 = vunpack.c.l.b16 %v563
      %v635 = vunpack.c.l.b16 %v564
      %v636 = vunpack.c.l.b16 %v565
      %v637 = vunpack.c.l.b16 %v566
      %v638 = vunpack.c.l.b16 %v567
      %v639 = vunpack.c.l.b16 %v568
      %v640 = vunpack.c.l.b16 %v569
      %v641 = vunpack.c.l.b16 %v570
      %v642 = vunpack.c.l.b16 %v571
      %v643 = vunpack.c.l.b16 %v572
      %v644 = vunpack.c.l.b16 %v573
      %v645 = vunpack.c.l.b16 %v574
      %v646 = vunpack.c.l.b16 %v575
      %v647 = vunpack.c.l.b16 %v576
      %v648 = vunpack.c.l.b16 %v577
      %v649 = vunpack.c.l.b16 %v578
      %v650 = vunpack.c.l.b16 %v579
      %v651 = vunpack.c.l.b16 %v580
      %v652 = vunpack.c.l.b16 %v581
      %v653 = vunpack.c.l.b16 %v582
      %v654 = vunpack.c.l.b16 %v583
      %v655 = vunpack.c.l.b16 %v584
      %v656 = vunpack.c.l.b16 %v585
      %v657 = vunpack.c.l.b16 %v586
      %v658 = vunpack.c.l.b16 %v587
      %v659 = vunpack.c.l.b16 %v588
      %v660 = vunpack.c.l.b16 %v589
      %v661 = vunpack.c.l.b16 %v590
      %v662 = vunpack.c.l.b16 %v591
      %v663 = vunpack.c.l.b16 %v592
      %v664 = vpack.c.b16 %v633, %v632
      %v665 = vpack.c.b16 %v635, %v634
      %v666 = vpack.c.b16 %v637, %v636
      %v667 = vpack.c.b16 %v639, %v638
      %v668 = vpack.c.b16 %v641, %v640
      %v669 = vpack.c.b16 %v643, %v642
      %v670 = vpack.c.b16 %v645, %v644
      %v671 = vpack.c.b16 %v647, %v646
      %v672 = vpack.c.b16 %v649, %v648
      %v673 = vpack.c.b16 %v651, %v650
      %v674 = vpack.c.b16 %v653, %v652
      %v675 = vpack.c.b16 %v655, %v654
      %v676 = vpack.c.b16 %v657, %v656
      %v677 = vpack.c.b16 %v659, %v658
      %v678 = vpack.c.b16 %v661, %v660
      %v679 = vpack.c.b16 %v663, %v662
      %696 = vmatprep.subr.bf16.mxu0 0
      %697 = vmatpush1.bf16.msra.mxu0 %v664
      %698 = vmatprep.subr.bf16.mxu0 0
      %699 = vmatpush1.bf16.msra.mxu0 %v665
      %700 = vmatprep.subr.bf16.mxu0 0
      %701 = vmatpush1.bf16.msra.mxu0 %v666
      %702 = vmatprep.subr.bf16.mxu0 0
      %703 = vmatpush1.bf16.msra.mxu0 %v667
      %704 = vmatprep.subr.bf16.mxu0 0
      %705 = vmatpush1.bf16.msra.mxu0 %v668
      %706 = vmatprep.subr.bf16.mxu0 0
      %707 = vmatpush1.bf16.msra.mxu0 %v669
      %708 = vmatprep.subr.bf16.mxu0 0
      %709 = vmatpush1.bf16.msra.mxu0 %v670
      %710 = vmatprep.subr.bf16.mxu0 0
      %711 = vmatpush1.bf16.msra.mxu0 %v671
      %712 = vmatprep.subr.bf16.mxu0 0
      %713 = vmatpush1.bf16.msra.mxu0 %v672
      %714 = vmatprep.subr.bf16.mxu0 0
      %715 = vmatpush1.bf16.msra.mxu0 %v673
      %716 = vmatprep.subr.bf16.mxu0 0
      %717 = vmatpush1.bf16.msra.mxu0 %v674
      %718 = vmatprep.subr.bf16.mxu0 0
      %719 = vmatpush1.bf16.msra.mxu0 %v675
      %720 = vmatprep.subr.bf16.mxu0 0
      %721 = vmatpush1.bf16.msra.mxu0 %v676
      %722 = vmatprep.subr.bf16.mxu0 0
      %723 = vmatpush1.bf16.msra.mxu0 %v677
      %724 = vmatprep.subr.bf16.mxu0 0
      %725 = vmatpush1.bf16.msra.mxu0 %v678
      %726 = vmatprep.subr.bf16.mxu0 0
      %727 = vmatpush1.bf16.msra.mxu0 %v679
      %728 = vmatprep.mubr.bf16.mxu0 %v560
      %729 = vmatmul.mubr.bf16.gmra.mrb[0].mxu0 %v559
      %v730 = vpop.f32.mrb[0].mxu0
      %v731 = vadd.f32 %v598, %v730
      %v732 = vpop.f32.mrb[0].mxu0
      %v733 = vpop.f32.mrb[0].mxu0
      %v734 = vadd.f32 %v598, %v733
      %v735 = vpop.f32.mrb[0].mxu0
      %736 = vdwg.mxu0
      %v737 = vmax.f32 %v731, 0.0
      %v738 = vmax.f32 %v734, 0.0
      %v739 = vld [vmem:[%s7] sm:$0x1]
      %v741 = vlaneseq
      %v742 = vshrl.u32 %v741, 7
      %v743 = vsub.s32 0, %v742
      %v744 = vrot.slane %v739, %v743
      %v746 = vmul.f32 %v737, %v744
      %v747 = vmul.f32 %v738, %v744
      %748 = vadd.xlane.f32.xlu0 %v746
      %v749 = vpop.xlane.xlu0 %748
      %750 = vadd.xlane.f32.xlu0 %v747
      %v751 = vpop.xlane.xlu0 %750
      %v752 = vld [vmem:[#allocation2] sm:$0x1]
      %v754 = vlaneseq
      %v755 = vshrl.u32 %v754, 7
      %v756 = vsub.s32 0, %v755
      %v757 = vrot.slane %v752, %v756
      %v759 = vadd.f32 %v749, %v757
      %v760 = vadd.f32 %v751, %v757
      %vm761 = vcmask 7168
      %762 = vst.msk [vmem:[%s358] sm:$0xff] %vm761, %v759
      %763 = vst.msk [vmem:[%s358 + $0x8] sm:$0xff] %vm761, %v760
      %s764 = smul.u32 2, %s22
      %p765 = scmp.lt.s32.totalorder %s764, 3
      %s766 = scalar_select %p765, %s764, 3
      %s767 = smul.addr %s766, 8
      %s768 = scalar_lea.vmem %s9, %s767
      // Predicated region
      $region57: #{ff_model_forward.1} parent=55 // pred_check
        %p769 = pneg %p239
      $region58: #{ff_model_forward.1} parent=55 // pred_check_branch
        %771 = sbr.rel (%p769) target = $region60
      $region59: #{ff_model_forward.1} parent=55 // pred_region
        %s772 = smul.u32 2, %s22
      $region60: #{ff_model_forward.1} parent=55 // pred_fallthru
        _
    $region56: #{ff_model_forward.1} parent=5 // pred_fallthru
      _
    %p773 = scmp.le.s32.totalorder 2, %s17
    // Predicated region
    $region61: #{ff_model_forward.1} parent=5 // pred_check
      %p774 = pneg %p773
    $region62: #{ff_model_forward.1} parent=5 // pred_check_branch
      %776 = sbr.rel (%p774) target = $region64
    $region63: #{ff_model_forward.1} parent=5 // pred_region
      %s777 = ssub.s32 %s17, 2
      // Predicated region
      $region65: #{ff_model_forward.1} parent=63 // pred_check
        %p778 = pneg %p245
      $region66: #{ff_model_forward.1} parent=63 // pred_check_branch
        %780 = sbr.rel (%p778) target = $region68
      $region67: #{ff_model_forward.1} parent=63 // pred_region
        %s781 = smul.u32 2, %s23
        %p782 = scmp.lt.s32.totalorder %s781, 3
        %s783 = scalar_select %p782, %s781, 3
        %s784 = smul.addr %s783, 8
        %s785 = scalar_lea.vmem %s9, %s784
      $region68: #{ff_model_forward.1} parent=63 // pred_fallthru
        _
    $region64: #{ff_model_forward.1} parent=5 // pred_fallthru
      _
  $region6: #{ff_model_forward.1} parent=0 // loop_footer
    %s21 = sadd.s32 1, %s17
  $region7: #{ff_model_forward.1} parent=0 // loop_footer_branch
    %16 = sbr.rel target = $region3
  $region8: #{ff_model_forward.1} parent=0 // loop_exit
    _

</llo_original>
